<compile_context>
chip_gen: v6e
topology: v6e:2x2x1
jax: 0.10.0
libtpu: 0.0.40
codegen_flags: <defaults>
</compile_context>

<pallas_src>
import functools

import jax
import jax.numpy as jnp
from jax import lax
from jax.experimental import pallas as pl
from jax.experimental.pallas import tpu as pltpu

LANE = 128
MAX_TILE_ROWS = 4096   # 4096 x 128 f32 = 2 MiB per buffer (double-buffered ~4 MiB)


# --------------------------- elementwise loss math ---------------------------
def _elementwise_gan_loss(x, *, gan_type, target_val, target_is_real, is_disc):
    """Elementwise GAN loss in f32, matching the PyTorch GANLoss definitions."""
    if gan_type == 'vanilla':                        # BCEWithLogitsLoss(x, t), stable
        t = jnp.float32(target_val)
        return jnp.maximum(x, 0.0) - x * t + jnp.log1p(jnp.exp(-jnp.abs(x)))
    if gan_type == 'lsgan':                          # MSELoss(x, t)
        d = x - jnp.float32(target_val)
        return d * d
    if gan_type == 'wgan':
        return -x if target_is_real else x
    if gan_type == 'wgan_softplus':
        z = -x if target_is_real else x
        return jnp.maximum(z, 0.0) + jnp.log1p(jnp.exp(-jnp.abs(z)))
    if gan_type == 'hinge':
        if is_disc:
            z = -x if target_is_real else x
            return jnp.maximum(1.0 + z, 0.0)         # ReLU(1 + input)
        return -x                                    # generator hinge: -mean(x)
    raise NotImplementedError(f'GAN type {gan_type} is not implemented.')


# --------------------------------- kernel ------------------------------------
def _gan_partial_kernel(x_ref, o_ref, *, gan_type, target_val, target_is_real,
                        is_disc, tile_rows, tile_elems, tiles_total,
                        tiles_per_core, tail_valid, covers_exact):
    c = pl.program_id(0)                             # core-split index
    i = pl.program_id(1)                             # tile index within the core
    g = c * tiles_per_core + i                       # global tile index

    @pl.when(i == 0)
    def _init():
        o_ref[...] = jnp.zeros_like(o_ref)

    x = x_ref[...].astype(jnp.float32)               # cast from source dtype in-reg
    elem = _elementwise_gan_loss(x, gan_type=gan_type, target_val=target_val,
                                 target_is_real=target_is_real, is_disc=is_disc)

    def _accumulate(e):
        # (tile_rows,128) -> (8,128): layout-preserving reshape + pure VPU adds;
        # accumulate into the resident (8,128) output block (no XLU, no big acc).
        o_ref[...] += jnp.sum(e.reshape(tile_rows // 8, 8, LANE), axis=0)

    has_tail_mask = (tail_valid != tile_elems)       # static Python bool

    full_cond = None                                 # None => statically always
    if not covers_exact:                             # odd tile count w/ core split
        full_cond = g < tiles_total
    if has_tail_mask:
        is_tail = g == (tiles_total - 1)
        not_tail = jnp.logical_not(is_tail)
        full_cond = not_tail if full_cond is None else jnp.logical_and(
            full_cond, not_tail)

        @pl.when(is_tail)                            # runs on exactly one tile
        def _tail():
            row = lax.broadcasted_iota(jnp.int32, (tile_rows, LANE), 0)
            lane = lax.broadcasted_iota(jnp.int32, (tile_rows, LANE), 1)
            _accumulate(jnp.where(row * LANE + lane < tail_valid, elem, 0.0))

    if full_cond is None:
        _accumulate(elem)                            # common case: zero guards
    else:
        @pl.when(full_cond)
        def _full():
            _accumulate(elem)


# ------------------------------ per-tensor wrapper ----------------------------
def _pick_tile_rows(rows, min_rows):
    """Smallest power-of-two tile >= rows, capped at MAX_TILE_ROWS."""
    t = min_rows
    while t < MAX_TILE_ROWS and t < rows:
        t *= 2
    return t


def _gan_loss_sum(x, *, gan_type, target_val, target_is_real, is_disc):
    """Sum of elementwise GAN loss over one prediction tensor (f32 scalar)."""
    n = int(x.size)
    flat = jnp.ravel(x)
    rem = n % LANE
    if rem:
        flat = jnp.pad(flat, (0, LANE - rem))        # only ragged tensors pay this
    rows = flat.shape[0] // LANE
    x2d = flat.reshape(rows, LANE)                   # contiguous -> metadata only

    # Respect sublane packing: (8,128) f32, (16,128) bf16, (32,128) int8/fp8.
    min_rows = max(8, 32 // jnp.dtype(x.dtype).itemsize)
    tile_rows = _pick_tile_rows(rows, min_rows)
    tile_elems = tile_rows * LANE

    tiles_total = -(-rows // tile_rows)
    split = 2 if tiles_total >= 2 else 1             # both TensorCores on v7x
    tiles_per_core = -(-tiles_total // split)
    covers_exact = (split * tiles_per_core == tiles_total)
    tail_valid = n - (tiles_total - 1) * tile_elems  # valid elems in the last tile

    kernel = functools.partial(
        _gan_partial_kernel, gan_type=gan_type, target_val=target_val,
        target_is_real=target_is_real, is_disc=is_disc,
        tile_rows=tile_rows, tile_elems=tile_elems, tiles_total=tiles_total,
        tiles_per_core=tiles_per_core, tail_valid=tail_valid,
        covers_exact=covers_exact)

    if covers_exact:
        def x_index_map(c, i):
            return (c * tiles_per_core + i, 0)
    else:
        def x_index_map(c, i):
            # Clamp the (at most one) overshoot tile of the last core; the
            # kernel skips its contribution via the g < tiles_total guard.
            return (jnp.minimum(c * tiles_per_core + i, tiles_total - 1), 0)

    partials = pl.pallas_call(
        kernel,
        out_shape=jax.ShapeDtypeStruct((split * 8, LANE), jnp.float32),
        grid_spec=pltpu.PrefetchScalarGridSpec(
            num_scalar_prefetch=0,
            grid=(split, tiles_per_core),
            in_specs=[pl.BlockSpec((tile_rows, LANE), x_index_map)],
            out_specs=pl.BlockSpec((8, LANE), lambda c, i: (c, 0)),
        ),
        compiler_params=pltpu.CompilerParams(
            dimension_semantics=("parallel", "arbitrary")),
    )(x2d)

    return jnp.sum(partials)                         # tiny: (split*8,128) -> scalar


# ------------------------------- module forward -------------------------------
def multi_scale_gan_loss(inputs, target_is_real, is_disc=False, *,
                         gan_type='lsgan', real_label_val=1.0,
                         fake_label_val=0.0, loss_weight=1.0):
    """MultiScaleGANLoss.forward: `inputs` is a tensor, a list of tensors, or a
    list of (list of tensors) -- in the nested case the last element is used."""
    if isinstance(inputs, (list, tuple)):
        preds = [p[-1] if isinstance(p, (list, tuple)) else p for p in inputs]
        divisor = float(len(inputs))
    else:
        preds = [inputs]
        divisor = 1.0

    target_val = float(real_label_val if target_is_real else fake_label_val)
    outer_w = 1.0 if is_disc else float(loss_weight)   # loss_weight only for gen

    total = jnp.float32(0.0)
    for p in preds:
        s = _gan_loss_sum(p, gan_type=gan_type, target_val=target_val,
                          target_is_real=bool(target_is_real),
                          is_disc=bool(is_disc))
        total = total + s * jnp.float32(outer_w / (float(p.size) * divisor))
    return total


# ------------------------- pure-JAX reference (for checking) ------------------
def _ref_gan_loss(x, *, gan_type, real_label_val, fake_label_val, loss_weight,
                  target_is_real, is_disc):
    x = x.astype(jnp.float32)
    t = jnp.float32(real_label_val if target_is_real else fake_label_val)
    if gan_type == 'vanilla':
        loss = jnp.mean(jnp.maximum(x, 0.0) - x * t + jnp.log1p(jnp.exp(-jnp.abs(x))))
    elif gan_type == 'lsgan':
        loss = jnp.mean((x - t) ** 2)
    elif gan_type == 'wgan':
        loss = -jnp.mean(x) if target_is_real else jnp.mean(x)
    elif gan_type == 'wgan_softplus':
        z = -x if target_is_real else x
        loss = jnp.mean(jnp.maximum(z, 0.0) + jnp.log1p(jnp.exp(-jnp.abs(z))))
    elif gan_type == 'hinge':
        if is_disc:
            z = -x if target_is_real else x
            loss = jnp.mean(jnp.maximum(1.0 + z, 0.0))
        else:
            loss = -jnp.mean(x)
    return loss if is_disc else loss * jnp.float32(loss_weight)


def _ref_multi_scale(inputs, target_is_real, is_disc=False, **kw):
    if isinstance(inputs, (list, tuple)):
        loss = jnp.float32(0.0)
        for p in inputs:
            if isinstance(p, (list, tuple)):
                p = p[-1]
            loss = loss + _ref_gan_loss(p, target_is_real=target_is_real,
                                        is_disc=is_disc, **kw)
        return loss / len(inputs)
    return _ref_gan_loss(inputs, target_is_real=target_is_real, is_disc=is_disc, **kw)


if __name__ == "__main__":
    key = jax.random.PRNGKey(0)
    k0, k1, k2, k3, k4, k5 = jax.random.split(key, 6)

    # Multi-scale discriminator outputs: plain tensor, nested list (last element
    # used), and one ragged tensor whose size is not a multiple of 128.
    pred_a = jax.random.normal(k0, (2, 4, 16, 16), dtype=jnp.float32)     # 2048 elems
    pred_b_feat = jax.random.normal(k1, (2, 8, 8, 8), dtype=jnp.float32)
    pred_b_out = jax.random.normal(k2, (2, 1, 8, 8), dtype=jnp.float32)   # 128 elems
    pred_c = jax.random.normal(k3, (2, 1, 18, 13), dtype=jnp.float32)     # 468 elems
    preds = [pred_a, [pred_b_feat, pred_b_out], pred_c]

    ok = True
    for gan_type in ['vanilla', 'lsgan', 'wgan', 'wgan_softplus', 'hinge']:
        for target_is_real in [True, False]:
            for is_disc in [True, False]:
                kw = dict(gan_type=gan_type, real_label_val=1.0,
                          fake_label_val=0.0, loss_weight=2.0)
                out = jax.block_until_ready(
                    multi_scale_gan_loss(preds, target_is_real, is_disc, **kw))
                ref = _ref_multi_scale(preds, target_is_real, is_disc, **kw)
                if not jnp.allclose(out, ref, rtol=1e-5, atol=1e-5):
                    ok = False

    kwl = dict(gan_type='lsgan', real_label_val=1.0, fake_label_val=0.0,
               loss_weight=2.0)

    # Single-tensor (non-list) path.
    out1 = jax.block_until_ready(multi_scale_gan_loss(pred_a, True, False, **kwl))
    ref1 = _ref_multi_scale(pred_a, True, False, **kwl)
    if not jnp.allclose(out1, ref1, rtol=1e-5, atol=1e-5):
        ok = False

    # bf16 prediction: exercises 16-row sublane packing + partial-tile masking.
    pred_d = jax.random.normal(k4, (2, 2, 16, 16), dtype=jnp.bfloat16)    # 1024 elems
    out2 = jax.block_until_ready(multi_scale_gan_loss([pred_d], True, False, **kwl))
    ref2 = _ref_multi_scale([pred_d], True, False, **kwl)
    if not jnp.allclose(out2, ref2, rtol=1e-4, atol=1e-4):
        ok = False

    # Larger prediction: 3 tiles of 4096 rows -> 2-core "parallel" split with an
    # odd tile count (exercises the clamped index_map + in-range guard).
    pred_e = jax.random.normal(k5, (2, 3, 512, 512), dtype=jnp.float32)   # 1.57M elems
    out3 = jax.block_until_ready(
        multi_scale_gan_loss([pred_e, pred_a], False, True, **kwl))
    ref3 = _ref_multi_scale([pred_e, pred_a], False, True, **kwl)
    if not jnp.allclose(out3, ref3, rtol=1e-4, atol=1e-5):
        ok = False

    if ok:
        print("KERNEL_OK")
</pallas_src>

<mosaic_0001>
module attributes {stable_mosaic.version = 11 : i64} {
  func.func @_gan_partial_kernel(%arg0: i32, %arg1: i32, %arg2: memref<16x128xf32, #tpu.memory_space<vmem>>, %arg3: memref<8x128xf32, #tpu.memory_space<vmem>>) attributes {dimension_semantics = [#tpu.dimension_semantics<parallel>, #tpu.dimension_semantics<arbitrary>], iteration_bounds = array<i64: 1, 1>, scalar_prefetch = 0 : i64, scratch_operands = 0 : i64, tpu.core_type = #tpu.core_type<tc>, window_params = [{transform_indices = @transform_0, window_bounds = array<i64: 16, 128>}, {transform_indices = @transform_1, window_bounds = array<i64: 8, 128>}]} {
    %c0_i32 = arith.constant 0 : i32
    %0 = arith.cmpi eq, %arg1, %c0_i32 : i32
    %1 = arith.extui %0 : i1 to i32
    %c0_i32_0 = arith.constant 0 : i32
    %2 = arith.cmpi ne, %1, %c0_i32_0 : i32
    scf.if %2 {
      %cst_9 = arith.constant 0.000000e+00 : f32
      %20 = vector.broadcast %cst_9 : f32 to vector<8x128xf32>
      %c0_10 = arith.constant 0 : index
      %c0_11 = arith.constant 0 : index
      %21 = vector.load %arg3[%c0_10, %c0_11] : memref<8x128xf32, #tpu.memory_space<vmem>>, vector<8x128xf32>
      tpu.vector_store %arg3[%c0_10, %c0_11], %20 {strides = array<i32>} : memref<8x128xf32, #tpu.memory_space<vmem>>, vector<8x128xf32>,
    } else {
    }
    %c0 = arith.constant 0 : index
    %c0_1 = arith.constant 0 : index
    %3 = vector.load %arg2[%c0, %c0_1] : memref<16x128xf32, #tpu.memory_space<vmem>>, vector<16x128xf32>
    %cst = arith.constant 0.000000e+00 : f32
    %4 = vector.broadcast %cst : f32 to vector<16x128xf32>
    %5 = arith.maximumf %3, %4 : vector<16x128xf32>
    %cst_2 = arith.constant 1.000000e+00 : f32
    %6 = vector.broadcast %cst_2 : f32 to vector<16x128xf32>
    %7 = arith.mulf %3, %6 : vector<16x128xf32>
    %8 = arith.subf %5, %7 : vector<16x128xf32>
    %9 = math.absf %3 : vector<16x128xf32>
    %cst_3 = arith.constant 0.000000e+00 : f32
    %10 = vector.broadcast %cst_3 : f32 to vector<16x128xf32>
    %11 = arith.subf %10, %9 : vector<16x128xf32>
    %12 = math.exp %11 : vector<16x128xf32>
    %13 = math.log1p %12 : vector<16x128xf32>
    %14 = arith.addf %8, %13 : vector<16x128xf32>
    %c0_4 = arith.constant 0 : index
    %c0_5 = arith.constant 0 : index
    %15 = vector.load %arg3[%c0_4, %c0_5] : memref<8x128xf32, #tpu.memory_space<vmem>>, vector<8x128xf32>
    %16 = vector.shape_cast %14 : vector<16x128xf32> to vector<2x8x128xf32>
    %cst_6 = arith.constant dense<0.000000e+00> : vector<8x128xf32>
    %17 = vector.multi_reduction <add>, %16, %cst_6 [0] : vector<2x8x128xf32> to vector<8x128xf32>
    %18 = arith.addf %15, %17 : vector<8x128xf32>
    %c0_7 = arith.constant 0 : index
    %c0_8 = arith.constant 0 : index
    %19 = vector.load %arg3[%c0_7, %c0_8] : memref<8x128xf32, #tpu.memory_space<vmem>>, vector<8x128xf32>
    tpu.vector_store %arg3[%c0_7, %c0_8], %18 {strides = array<i32>} : memref<8x128xf32, #tpu.memory_space<vmem>>, vector<8x128xf32>,
    return
  }
  func.func @transform_0(%arg0: i32, %arg1: i32) -> (i32, i32) {
    %c1_i32 = arith.constant 1 : i32
    %0 = arith.muli %arg0, %c1_i32 : i32
    %1 = arith.addi %0, %arg1 : i32
    %c0_i32 = arith.constant 0 : i32
    %c0_i32_0 = arith.constant 0 : i32
    return %1, %c0_i32 : i32, i32
  }
  func.func @transform_1(%arg0: i32, %arg1: i32) -> (i32, i32) {
    %c0_i32 = arith.constant 0 : i32
    %c0_i32_0 = arith.constant 0 : i32
    return %arg0, %c0_i32 : i32, i32
  }
}

</mosaic_0001>

<llo_original>
// kernel: tpu_custom_call.1
$region0: #{tpu_custom_call.1}
  #allocation0 [shape = 'u32[]', space=smem, size = 0x4, offset = 0x4, fixed_abs, tag = 'smem constant byte address 0x4 - core index']
  #allocation1 [shape = 'u32[144,128]{1,0:T(1,128)}', space=vmem, size = 0x12000, scoped, tag = 'internal scratch']
  %s0 = inlined_call_operand.hbm [shape: f32[16,128], index: 0, kind: input, shape index: {}]
  %s1 = inlined_call_operand.hbm [shape: f32[8,128], index: 1, kind: output, shape index: {}]
  %s2 = sld [smem:[#allocation0]]
  $region22: #{tpu_custom_call.1} parent=0
    _
  %s4 = ssub.s32 1, %s2
  %s5 = scalar_select 0, %s4, %s2
  $region1: #{tpu_custom_call.1} parent=0
    #allocation2 [shape = 'u8[8192]{0}', space=vmem, size = 0x2000, scoped, tag = 'input window, operand 0, single buffered']
    #allocation3 [shape = 's32[1]{0}', space=sflag, size = 0x4, scoped, tag = 'scoped memory for tpu_custom_call.1']
    #allocation4 [shape = 's32[1]{0}', space=sflag, size = 0x4, scoped, tag = 'scoped memory for tpu_custom_call.1']
    #allocation5 [shape = 'u8[4096]{0}', space=vmem, size = 0x1000, scoped, tag = 'output window, operand 0, single buffered']
    %6 = vsyncpa [#allocation3], 0
    %7 = vsyncpa [#allocation4], 0
    // Predicated region
    $region2: #{tpu_custom_call.1} parent=1 // pred_check
      _
    $region3: #{tpu_custom_call.1} parent=1 // pred_check_branch
      %9 = sbr.rel (0) target = $region5
    $region4: #{tpu_custom_call.1} parent=1 // pred_region
      %s10 = sadd.s32 0, 0
      %s11 = smul.u32 2, %s10
      %s13 = ssub.s32 256, 256
      %14 = vsyncadd [#allocation3], %s13
      %s15 = smul.addr %s11, 128
      %s16 = scalar_lea.hbm %s0, %s15
      %s17 = sshll.u32 [#allocation2], 4
      %s18 = int_to_ptr.vmem [resolvable:$true] %s17
      %23 = dma.hbm_to_vmem [thread:$0]  %s16, 256, %s18, [#allocation3], 128, 128, 8
    $region5: #{tpu_custom_call.1} parent=1 // pred_fallthru
      _
    // Predicated region
    $region6: #{tpu_custom_call.1} parent=1 // pred_check
      _
    $region7: #{tpu_custom_call.1} parent=1 // pred_check_branch
      %25 = sbr.rel (0) target = $region9
    $region8: #{tpu_custom_call.1} parent=1 // pred_region
      %26 = dma.done [#allocation3], 256
    $region9: #{tpu_custom_call.1} parent=1 // pred_fallthru
      _
    %s27 = sadd.s32 0, 0
    %s28 = smul.u32 2, %s27
    %p29 = scmp.eq.s32.totalorder 0, 0
    // Predicated region
    $region10: #{tpu_custom_call.1} parent=1 // pred_check
      %p30 = pneg %p29
    $region11: #{tpu_custom_call.1} parent=1 // pred_check_branch
      %32 = sbr.rel (%p30) target = $region13
    $region12: #{tpu_custom_call.1} parent=1 // pred_region
      %33 = vst [vmem:[#allocation5] sm:$0xff] 0.0
    $region13: #{tpu_custom_call.1} parent=1 // pred_fallthru
      _
    %v34 = vld [vmem:[#allocation2] sm:$0xff]
    %v35 = vld [vmem:[#allocation2 + $0x8] sm:$0xff]
    %v36 = vmax.f32 %v34, 0.0
    %v37 = vmax.f32 %v35, 0.0
    %v38 = vsub.f32 %v36, %v34
    %v39 = vsub.f32 %v37, %v35
    %v40 = vand.u32 2147483647, %v34
    %v41 = vand.u32 2147483647, %v35
    %v42 = vsub.f32 0.0, %v40
    %v43 = vsub.f32 0.0, %v41
    %v44 = vmul.f32 %v42, 1.442695
    %v45 = vpow.pop %v44
    %v46 = vmul.f32 %v43, 1.442695
    %v47 = vpow.pop %v46
    %v48 = vadd.f32 %v45, 1.0
    %v49 = vlog2.pop %v48
    %v50 = vmul.f32 %v49, 0.6931472
    %v51 = vmul.f32 -0.5, %v45
    %v52 = vadd.f32 %v51, 1.0
    %v53 = vmul.f32 %v52, %v45
    %v54 = vand.u32 2147483647, %v45
    %vm55 = vcmp.lt.f32.partialorder %v54, 0.0004427343
    %v56 = vsel %vm55, %v53, %v50
    %v57 = vadd.f32 %v47, 1.0
    %v58 = vlog2.pop %v57
    %v59 = vmul.f32 %v58, 0.6931472
    %v60 = vmul.f32 -0.5, %v47
    %v61 = vadd.f32 %v60, 1.0
    %v62 = vmul.f32 %v61, %v47
    %v63 = vand.u32 2147483647, %v47
    %vm64 = vcmp.lt.f32.partialorder %v63, 0.0004427343
    %v65 = vsel %vm64, %v62, %v59
    %v66 = vadd.f32 %v38, %v56
    %v67 = vadd.f32 %v39, %v65
    %v68 = vld [vmem:[#allocation5] sm:$0xff]
    %v69 = vadd.f32 %v66, %v67
    %v70 = vadd.f32 %v68, %v69
    %71 = vst [vmem:[#allocation5] sm:$0xff] %v70
    // Predicated region
    $region14: #{tpu_custom_call.1} parent=1 // pred_check
      _
    $region15: #{tpu_custom_call.1} parent=1 // pred_check_branch
      %73 = sbr.rel (0) target = $region17
    $region16: #{tpu_custom_call.1} parent=1 // pred_region
      %s75 = ssub.s32 128, 128
      %76 = vsyncadd [#allocation4], %s75
      %s78 = sshll.u32 [#allocation5], 4
      %s79 = int_to_ptr.vmem [resolvable:$true] %s78
      %81 = dma.vmem_to_hbm [thread:$0]  %s79, 128, %s1, [#allocation4]
    $region17: #{tpu_custom_call.1} parent=1 // pred_fallthru
      _
    // Predicated region
    $region18: #{tpu_custom_call.1} parent=1 // pred_check
      _
    $region19: #{tpu_custom_call.1} parent=1 // pred_check_branch
      %83 = sbr.rel (0) target = $region21
    $region20: #{tpu_custom_call.1} parent=1 // pred_region
      %84 = dma.done [#allocation4], 128
    $region21: #{tpu_custom_call.1} parent=1 // pred_fallthru
      _
    %85 = vsyncpa [#allocation3], 1
    %86 = vsyncpa [#allocation4], 1

</llo_original>
